<compile_context>
chip_gen: v7x
topology: tpu7x:2x2x1
jax: 0.10.0
libtpu: 0.0.40
codegen_flags: <defaults>
</compile_context>

<pallas_src>
import jax
import jax.numpy as jnp
from jax.experimental import pallas as pl
from jax.experimental.pallas import tpu as pltpu


def _round_up(x: int, m: int) -> int:
    return ((x + m - 1) // m) * m


def ffn_kernel(x_ref, w1_ref, b1_ref, w2_ref, b2_ref, o_ref, acc_ref):
    # Grid: (i over row tiles [parallel], k over d_ff slabs [reduction]).
    # x_ref:  (tm, dm_p)       w1_ref: (dm_p, tf)    b1_ref: (1, tf)
    # w2_ref: (tf, dm_p)       b2_ref: (1, dm_p)
    # o_ref:  (tm, dm_p)       acc_ref: (tm, dm_p) f32 scratch
    k = pl.program_id(1)

    @pl.when(k == 0)
    def _():
        acc_ref[...] = jnp.zeros_like(acc_ref)

    # First linear on one d_ff slab (f32 accumulation on the MXU).
    h = jnp.dot(x_ref[...], w1_ref[...], preferred_element_type=jnp.float32)
    h = h + b1_ref[...]
    # Dropout is identity in eval mode.
    # Feed the second matmul at the input operand width (bf16 in -> bf16 MXU).
    h = h.astype(x_ref.dtype)

    acc_ref[...] += jnp.dot(h, w2_ref[...], preferred_element_type=jnp.float32)

    @pl.when(k == pl.num_programs(1) - 1)
    def _():
        o_ref[...] = (acc_ref[...] + b2_ref[...]).astype(o_ref.dtype)


def feed_forward_block(x, w1, b1, w2, b2, *, tm=256, tf=512):
    """Eval-mode FFN.

    x : (B, S, d_model)
    w1: (d_model, d_ff), b1: (d_ff,)      -- linear_1 (weights pre-transposed)
    w2: (d_ff, d_model), b2: (d_model,)   -- linear_2 (weights pre-transposed)
    """
    B, S, d_model = x.shape
    d_ff = w1.shape[1]
    M = B * S

    # Row tile: multiple of 8, no larger than the padded row count.
    tm = max(8, min(tm, _round_up(M, 8)))
    m_pad = _round_up(M, tm)

    # Lane-dense feature dims: pad to multiples of 128; tf is a 128-multiple
    # that divides the padded d_ff.
    dm_p = _round_up(d_model, 128)
    tf = max(128, min(tf, _round_up(d_ff, 128)))
    dff_p = _round_up(d_ff, tf)

    # Zero padding is exact: padded x cols / W1 rows add 0 to h; padded d_ff
    # columns have h == 0 so they add 0 to the output; padded d_model output
    # columns are sliced off below.
    x2d = jnp.pad(x.reshape(M, d_model), ((0, m_pad - M), (0, dm_p - d_model)))
    w1p = jnp.pad(w1, ((0, dm_p - d_model), (0, dff_p - d_ff)))
    b1p = jnp.pad(b1.reshape(1, d_ff), ((0, 0), (0, dff_p - d_ff)))
    w2p = jnp.pad(w2, ((0, dff_p - d_ff), (0, dm_p - d_model)))
    b2p = jnp.pad(b2.reshape(1, d_model), ((0, 0), (0, dm_p - d_model)))

    grid = (m_pad // tm, dff_p // tf)

    itemsize = jnp.dtype(x.dtype).itemsize
    cost = pl.CostEstimate(
        flops=4 * m_pad * dm_p * dff_p,  # two matmuls, 2 flops per MAC
        transcendentals=0,
        bytes_accessed=itemsize * (2 * m_pad * dm_p        # x in, out
                                   + 2 * dm_p * dff_p      # W1, W2
                                   + dff_p + dm_p),        # b1, b2
    )

    out2d = pl.pallas_call(
        ffn_kernel,
        out_shape=jax.ShapeDtypeStruct((m_pad, dm_p), x.dtype),
        grid_spec=pltpu.PrefetchScalarGridSpec(
            num_scalar_prefetch=0,
            grid=grid,
            in_specs=[
                pl.BlockSpec((tm, dm_p), lambda i, k: (i, 0)),   # x row tile
                pl.BlockSpec((dm_p, tf), lambda i, k: (0, k)),   # W1 slab
                pl.BlockSpec((1, tf), lambda i, k: (0, k)),      # b1 slab
                pl.BlockSpec((tf, dm_p), lambda i, k: (k, 0)),   # W2 slab
                pl.BlockSpec((1, dm_p), lambda i, k: (0, 0)),    # b2 (resident)
            ],
            out_specs=pl.BlockSpec((tm, dm_p), lambda i, k: (i, 0)),
            scratch_shapes=[pltpu.VMEM((tm, dm_p), jnp.float32)],
        ),
        compiler_params=pltpu.CompilerParams(
            dimension_semantics=("parallel", "arbitrary"),
            vmem_limit_bytes=64 * 1024 * 1024,
        ),
        cost_estimate=cost,
    )(x2d, w1p, b1p, w2p, b2p)

    return out2d[:M, :d_model].reshape(B, S, d_model)


if __name__ == "__main__":
    def ref_ffn(x, w1, b1, w2, b2):
        B, S, d_model = x.shape
        y = (x.reshape(B * S, d_model) @ w1 + b1) @ w2 + b2
        return y.reshape(B, S, d_model)

    key = jax.random.PRNGKey(0)

    # Case 1: lane-aligned small shapes. Case 2: exercises the padding path.
    for (B, S, d_model, d_ff) in [(2, 8, 128, 256), (2, 7, 32, 96)]:
        key, kx, kw1, kb1, kw2, kb2 = jax.random.split(key, 6)

        x = jax.random.normal(kx, (B, S, d_model), dtype=jnp.float32)

        # Deterministic init roughly matching nn.Linear bounds; weights are
        # stored pre-transposed as (in_features, out_features).
        bound1 = 1.0 / (d_model ** 0.5)
        bound2 = 1.0 / (d_ff ** 0.5)
        w1 = jax.random.uniform(kw1, (d_model, d_ff), jnp.float32, -bound1, bound1)
        b1 = jax.random.uniform(kb1, (d_ff,), jnp.float32, -bound1, bound1)
        w2 = jax.random.uniform(kw2, (d_ff, d_model), jnp.float32, -bound2, bound2)
        b2 = jax.random.uniform(kb2, (d_model,), jnp.float32, -bound2, bound2)

        out = jax.block_until_ready(feed_forward_block(x, w1, b1, w2, b2))
        ref = ref_ffn(x, w1, b1, w2, b2)

        assert out.shape == (B, S, d_model)
        assert jnp.allclose(out, ref, atol=1e-4, rtol=1e-4), "mismatch vs reference"

    print("KERNEL_OK")
</pallas_src>

<mosaic_0001>
module attributes {stable_mosaic.version = 11 : i64} {
  func.func @ffn_kernel(%arg0: i32, %arg1: i32, %arg2: memref<16x128xf32, #tpu.memory_space<vmem>>, %arg3: memref<128x256xf32, #tpu.memory_space<vmem>>, %arg4: memref<1x256xf32, #tpu.memory_space<vmem>>, %arg5: memref<256x128xf32, #tpu.memory_space<vmem>>, %arg6: memref<1x128xf32, #tpu.memory_space<vmem>>, %arg7: memref<16x128xf32, #tpu.memory_space<vmem>>, %arg8: memref<16x128xf32, #tpu.memory_space<vmem>>) attributes {dimension_semantics = [#tpu.dimension_semantics<parallel>, #tpu.dimension_semantics<arbitrary>], iteration_bounds = array<i64: 1, 1>, scalar_prefetch = 0 : i64, scratch_operands = 1 : i64, tpu.core_type = #tpu.core_type<tc>, window_params = [{transform_indices = @transform_0, window_bounds = array<i64: 16, 128>}, {transform_indices = @transform_1, window_bounds = array<i64: 128, 256>}, {transform_indices = @transform_2, window_bounds = array<i64: 1, 256>}, {transform_indices = @transform_3, window_bounds = array<i64: 256, 128>}, {pipeline_mode = #tpu.pipeline_mode<synchronous>, transform_indices = @transform_4, window_bounds = array<i64: 1, 128>}, {transform_indices = @transform_5, window_bounds = array<i64: 16, 128>}]} {
    %c0_i32 = arith.constant 0 : i32
    %0 = arith.cmpi eq, %arg1, %c0_i32 : i32
    %1 = arith.extui %0 : i1 to i32
    %c0_i32_0 = arith.constant 0 : i32
    %2 = arith.cmpi ne, %1, %c0_i32_0 : i32
    scf.if %2 {
      %cst_15 = arith.constant 0.000000e+00 : f32
      %17 = vector.broadcast %cst_15 : f32 to vector<16x128xf32>
      %c0_16 = arith.constant 0 : index
      %c0_17 = arith.constant 0 : index
      %18 = vector.load %arg8[%c0_16, %c0_17] : memref<16x128xf32, #tpu.memory_space<vmem>>, vector<16x128xf32>
      tpu.vector_store %arg8[%c0_16, %c0_17], %17 {strides = array<i32>} : memref<16x128xf32, #tpu.memory_space<vmem>>, vector<16x128xf32>,
    } else {
    }
    %c0 = arith.constant 0 : index
    %c0_1 = arith.constant 0 : index
    %3 = vector.load %arg2[%c0, %c0_1] : memref<16x128xf32, #tpu.memory_space<vmem>>, vector<16x128xf32>
    %c0_2 = arith.constant 0 : index
    %c0_3 = arith.constant 0 : index
    %4 = vector.load %arg3[%c0_2, %c0_3] : memref<128x256xf32, #tpu.memory_space<vmem>>, vector<128x256xf32>
    %cst = arith.constant dense<0.000000e+00> : vector<16x256xf32>
    %5 = tpu.matmul %3, %4, %cst {dimension_numbers = #tpu.dot_dimension_numbers<[1], [0], [0], [1], [0, 0, 1, 1], [], []>} : vector<16x128xf32>, vector<128x256xf32>, vector<16x256xf32> -> vector<16x256xf32>
    %c0_4 = arith.constant 0 : index
    %c0_5 = arith.constant 0 : index
    %6 = vector.load %arg4[%c0_4, %c0_5] : memref<1x256xf32, #tpu.memory_space<vmem>>, vector<1x256xf32>
    %7 = vector.broadcast %6 : vector<1x256xf32> to vector<16x256xf32>
    %8 = arith.addf %5, %7 : vector<16x256xf32>
    %c0_6 = arith.constant 0 : index
    %c0_7 = arith.constant 0 : index
    %9 = vector.load %arg8[%c0_6, %c0_7] : memref<16x128xf32, #tpu.memory_space<vmem>>, vector<16x128xf32>
    %c0_8 = arith.constant 0 : index
    %c0_9 = arith.constant 0 : index
    %10 = vector.load %arg5[%c0_8, %c0_9] : memref<256x128xf32, #tpu.memory_space<vmem>>, vector<256x128xf32>
    %cst_10 = arith.constant dense<0.000000e+00> : vector<16x128xf32>
    %11 = tpu.matmul %8, %10, %cst_10 {dimension_numbers = #tpu.dot_dimension_numbers<[1], [0], [0], [1], [0, 0, 1, 1], [], []>} : vector<16x256xf32>, vector<256x128xf32>, vector<16x128xf32> -> vector<16x128xf32>
    %12 = arith.addf %9, %11 : vector<16x128xf32>
    %c0_11 = arith.constant 0 : index
    %c0_12 = arith.constant 0 : index
    %13 = vector.load %arg8[%c0_11, %c0_12] : memref<16x128xf32, #tpu.memory_space<vmem>>, vector<16x128xf32>
    tpu.vector_store %arg8[%c0_11, %c0_12], %12 {strides = array<i32>} : memref<16x128xf32, #tpu.memory_space<vmem>>, vector<16x128xf32>,
    %c0_i32_13 = arith.constant 0 : i32
    %14 = arith.cmpi eq, %arg1, %c0_i32_13 : i32
    %15 = arith.extui %14 : i1 to i32
    %c0_i32_14 = arith.constant 0 : i32
    %16 = arith.cmpi ne, %15, %c0_i32_14 : i32
    scf.if %16 {
      %c0_15 = arith.constant 0 : index
      %c0_16 = arith.constant 0 : index
      %17 = vector.load %arg8[%c0_15, %c0_16] : memref<16x128xf32, #tpu.memory_space<vmem>>, vector<16x128xf32>
      %c0_17 = arith.constant 0 : index
      %c0_18 = arith.constant 0 : index
      %18 = vector.load %arg6[%c0_17, %c0_18] : memref<1x128xf32, #tpu.memory_space<vmem>>, vector<1x128xf32>
      %19 = vector.broadcast %18 : vector<1x128xf32> to vector<16x128xf32>
      %20 = arith.addf %17, %19 : vector<16x128xf32>
      %c0_19 = arith.constant 0 : index
      %c0_20 = arith.constant 0 : index
      %21 = vector.load %arg7[%c0_19, %c0_20] : memref<16x128xf32, #tpu.memory_space<vmem>>, vector<16x128xf32>
      tpu.vector_store %arg7[%c0_19, %c0_20], %20 {strides = array<i32>} : memref<16x128xf32, #tpu.memory_space<vmem>>, vector<16x128xf32>,
    } else {
    }
    return
  }
  func.func @transform_0(%arg0: i32, %arg1: i32) -> (i32, i32) {
    %c0_i32 = arith.constant 0 : i32
    %c0_i32_0 = arith.constant 0 : i32
    return %arg0, %c0_i32 : i32, i32
  }
  func.func @transform_1(%arg0: i32, %arg1: i32) -> (i32, i32) {
    %c0_i32 = arith.constant 0 : i32
    %c0_i32_0 = arith.constant 0 : i32
    return %c0_i32, %arg1 : i32, i32
  }
  func.func @transform_2(%arg0: i32, %arg1: i32) -> (i32, i32) {
    %c0_i32 = arith.constant 0 : i32
    %c0_i32_0 = arith.constant 0 : i32
    return %c0_i32, %arg1 : i32, i32
  }
  func.func @transform_3(%arg0: i32, %arg1: i32) -> (i32, i32) {
    %c0_i32 = arith.constant 0 : i32
    %c0_i32_0 = arith.constant 0 : i32
    return %arg1, %c0_i32 : i32, i32
  }
  func.func @transform_4(%arg0: i32, %arg1: i32) -> (i32, i32) {
    %c0_i32 = arith.constant 0 : i32
    %c0_i32_0 = arith.constant 0 : i32
    %c0_i32_1 = arith.constant 0 : i32
    return %c0_i32, %c0_i32_0 : i32, i32
  }
  func.func @transform_5(%arg0: i32, %arg1: i32) -> (i32, i32) {
    %c0_i32 = arith.constant 0 : i32
    %c0_i32_0 = arith.constant 0 : i32
    return %arg0, %c0_i32 : i32, i32
  }
}

</mosaic_0001>

<llo_original>
// kernel: tpu_custom_call.1
$region0: #{tpu_custom_call.1}
  #allocation0 [shape = 'u32[]', space=smem, size = 0x4, offset = 0x4, fixed_abs, tag = 'smem constant byte address 0x4 - core index']
  #allocation1 [shape = 'u32[144,128]{1,0:T(1,128)}', space=vmem, size = 0x12000, scoped, tag = 'internal scratch']
  #allocation2 [shape = 'f32[16,128]{1,0:T(8,128)}', space=vmem, size = 0x2000, scoped, tag = 'scratch operand']
  %s0 = inlined_call_operand.hbm [shape: f32[16,128], index: 0, kind: input, shape index: {}]
  %s1 = inlined_call_operand.hbm [shape: f32[128,256], index: 1, kind: input, shape index: {}]
  %s2 = inlined_call_operand.hbm [shape: f32[1,256], index: 2, kind: input, shape index: {}]
  %s3 = inlined_call_operand.hbm [shape: f32[256,128], index: 3, kind: input, shape index: {}]
  %s4 = inlined_call_operand.hbm [shape: f32[1,128], index: 4, kind: input, shape index: {}]
  %s5 = inlined_call_operand.hbm [shape: f32[16,128], index: 5, kind: output, shape index: {}]
  %s6 = sld [smem:[#allocation0]]
  $region58: #{tpu_custom_call.1} parent=0
    _
  %s8 = ssub.s32 1, %s6
  %s9 = scalar_select 0, %s8, %s6
  $region1: #{tpu_custom_call.1} parent=0
    #allocation3 [shape = 'u8[8192]{0}', space=vmem, size = 0x2000, scoped, tag = 'input window, operand 0, single buffered']
    #allocation4 [shape = 's32[1]{0}', space=sflag, size = 0x4, scoped, tag = 'scoped memory for tpu_custom_call.1']
    #allocation5 [shape = 's32[1]{0}', space=sflag, size = 0x4, scoped, tag = 'scoped memory for tpu_custom_call.1']
    #allocation6 [shape = 'u8[131072]{0}', space=vmem, size = 0x20000, scoped, tag = 'input window, operand 1, single buffered']
    #allocation7 [shape = 's32[1]{0}', space=sflag, size = 0x4, scoped, tag = 'scoped memory for tpu_custom_call.1']
    #allocation8 [shape = 'u8[1024]{0}', space=vmem, size = 0x400, scoped, tag = 'input window, operand 2, single buffered']
    #allocation9 [shape = 'u8[131072]{0}', space=vmem, size = 0x20000, scoped, tag = 'input window, operand 3, single buffered']
    #allocation10 [shape = 's32[1]{0}', space=sflag, size = 0x4, scoped, tag = 'scoped memory for tpu_custom_call.1']
    #allocation11 [shape = 'u8[512]{0}', space=vmem, size = 0x400, scoped, tag = 'input window, operand 4, single buffered']
    #allocation12 [shape = 'u8[8192]{0}', space=vmem, size = 0x2000, scoped, tag = 'output window, operand 0, single buffered']
    %10 = vsyncpa [#allocation4], 0
    %11 = vsyncpa [#allocation7], 0
    %12 = vsyncpa [#allocation10], 0
    %13 = vsyncpa [#allocation5], 0
    // Predicated region
    $region2: #{tpu_custom_call.1} parent=1 // pred_check
      _
    $region3: #{tpu_custom_call.1} parent=1 // pred_check_branch
      %15 = sbr.rel (0) target = $region5
    $region4: #{tpu_custom_call.1} parent=1 // pred_region
      %s17 = ssub.s32 256, 256
      %18 = vsyncadd [#allocation4], %s17
      %s19 = sshll.u32 [#allocation3], 4
      %s20 = int_to_ptr.vmem [resolvable:$true] %s19
      %25 = dma.hbm_to_vmem [thread:$0]  %s0, 256, %s20, [#allocation4], 128, 128, 8
    $region5: #{tpu_custom_call.1} parent=1 // pred_fallthru
      _
    // Predicated region
    $region6: #{tpu_custom_call.1} parent=1 // pred_check
      _
    $region7: #{tpu_custom_call.1} parent=1 // pred_check_branch
      %27 = sbr.rel (0) target = $region9
    $region8: #{tpu_custom_call.1} parent=1 // pred_region
      %s29 = ssub.s32 4096, 4096
      %30 = vsyncadd [#allocation7], %s29
      %s31 = sshll.u32 [#allocation6], 4
      %s32 = int_to_ptr.vmem [resolvable:$true] %s31
      %37 = dma.hbm_to_vmem [thread:$0]  %s1, 4096, %s32, [#allocation7], 256, 256, 16
    $region9: #{tpu_custom_call.1} parent=1 // pred_fallthru
      _
    // Predicated region
    $region10: #{tpu_custom_call.1} parent=1 // pred_check
      _
    $region11: #{tpu_custom_call.1} parent=1 // pred_check_branch
      %39 = sbr.rel (0) target = $region13
    $region12: #{tpu_custom_call.1} parent=1 // pred_region
      %s41 = ssub.s32 32, 32
      %42 = vsyncadd [#allocation7], %s41
      %s44 = sshll.u32 [#allocation8], 4
      %s45 = int_to_ptr.vmem [resolvable:$true] %s44
      %47 = dma.hbm_to_vmem [thread:$0]  %s2, 32, %s45, [#allocation7]
    $region13: #{tpu_custom_call.1} parent=1 // pred_fallthru
      _
    // Predicated region
    $region14: #{tpu_custom_call.1} parent=1 // pred_check
      _
    $region15: #{tpu_custom_call.1} parent=1 // pred_check_branch
      %49 = sbr.rel (0) target = $region17
    $region16: #{tpu_custom_call.1} parent=1 // pred_region
      %s51 = ssub.s32 4096, 4096
      %52 = vsyncadd [#allocation10], %s51
      %s53 = sshll.u32 [#allocation9], 4
      %s54 = int_to_ptr.vmem [resolvable:$true] %s53
      %59 = dma.hbm_to_vmem [thread:$0]  %s3, 4096, %s54, [#allocation10], 128, 128, 8
    $region17: #{tpu_custom_call.1} parent=1 // pred_fallthru
      _
    // Predicated region
    $region18: #{tpu_custom_call.1} parent=1 // pred_check
      _
    $region19: #{tpu_custom_call.1} parent=1 // pred_check_branch
      %61 = sbr.rel (0) target = $region21
    $region20: #{tpu_custom_call.1} parent=1 // pred_region
      %s63 = ssub.s32 16, 16
      %64 = vsyncadd [#allocation10], %s63
      %s66 = sshll.u32 [#allocation11], 4
      %s67 = int_to_ptr.vmem [resolvable:$true] %s66
      %69 = dma.hbm_to_vmem [thread:$0]  %s4, 16, %s67, [#allocation10]
    $region21: #{tpu_custom_call.1} parent=1 // pred_fallthru
      _
    // Predicated region
    $region22: #{tpu_custom_call.1} parent=1 // pred_check
      _
    $region23: #{tpu_custom_call.1} parent=1 // pred_check_branch
      %71 = sbr.rel (0) target = $region25
    $region24: #{tpu_custom_call.1} parent=1 // pred_region
      %72 = dma.done [#allocation4], 256
    $region25: #{tpu_custom_call.1} parent=1 // pred_fallthru
      _
    // Predicated region
    $region26: #{tpu_custom_call.1} parent=1 // pred_check
      _
    $region27: #{tpu_custom_call.1} parent=1 // pred_check_branch
      %74 = sbr.rel (0) target = $region29
    $region28: #{tpu_custom_call.1} parent=1 // pred_region
      %75 = dma.done [#allocation7], 4096
    $region29: #{tpu_custom_call.1} parent=1 // pred_fallthru
      _
    // Predicated region
    $region30: #{tpu_custom_call.1} parent=1 // pred_check
      _
    $region31: #{tpu_custom_call.1} parent=1 // pred_check_branch
      %77 = sbr.rel (0) target = $region33
    $region32: #{tpu_custom_call.1} parent=1 // pred_region
      %78 = dma.done [#allocation7], 32
    $region33: #{tpu_custom_call.1} parent=1 // pred_fallthru
      _
    // Predicated region
    $region34: #{tpu_custom_call.1} parent=1 // pred_check
      _
    $region35: #{tpu_custom_call.1} parent=1 // pred_check_branch
      %80 = sbr.rel (0) target = $region37
    $region36: #{tpu_custom_call.1} parent=1 // pred_region
      %81 = dma.done [#allocation10], 4096
    $region37: #{tpu_custom_call.1} parent=1 // pred_fallthru
      _
    // Predicated region
    $region38: #{tpu_custom_call.1} parent=1 // pred_check
      _
    $region39: #{tpu_custom_call.1} parent=1 // pred_check_branch
      %83 = sbr.rel (0) target = $region41
    $region40: #{tpu_custom_call.1} parent=1 // pred_region
      %84 = dma.done [#allocation10], 16
    $region41: #{tpu_custom_call.1} parent=1 // pred_fallthru
      _
    %p85 = scmp.eq.s32.totalorder 0, 0
    // Predicated region
    $region42: #{tpu_custom_call.1} parent=1 // pred_check
      %p86 = pneg %p85
    $region43: #{tpu_custom_call.1} parent=1 // pred_check_branch
      %88 = sbr.rel (%p86) target = $region45
    $region44: #{tpu_custom_call.1} parent=1 // pred_region
      %89 = vst [vmem:[#allocation2] sm:$0xff] 0.0
      %90 = vst [vmem:[#allocation2 + $0x8] sm:$0xff] 0.0
    $region45: #{tpu_custom_call.1} parent=1 // pred_fallthru
      _
    %v91 = vld [vmem:[#allocation3] sm:$0xff]
    %v92 = vld [vmem:[#allocation3 + $0x8] sm:$0xff]
    %v93 = vld [vmem:[#allocation6] sm:$0xff]
    %v94 = vld [vmem:[#allocation6 + $0x8] sm:$0xff]
    %v95 = vld [vmem:[#allocation6 + $0x10] sm:$0xff]
    %v96 = vld [vmem:[#allocation6 + $0x18] sm:$0xff]
    %v97 = vld [vmem:[#allocation6 + $0x20] sm:$0xff]
    %v98 = vld [vmem:[#allocation6 + $0x28] sm:$0xff]
    %v99 = vld [vmem:[#allocation6 + $0x30] sm:$0xff]
    %v100 = vld [vmem:[#allocation6 + $0x38] sm:$0xff]
    %v101 = vld [vmem:[#allocation6 + $0x40] sm:$0xff]
    %v102 = vld [vmem:[#allocation6 + $0x48] sm:$0xff]
    %v103 = vld [vmem:[#allocation6 + $0x50] sm:$0xff]
    %v104 = vld [vmem:[#allocation6 + $0x58] sm:$0xff]
    %v105 = vld [vmem:[#allocation6 + $0x60] sm:$0xff]
    %v106 = vld [vmem:[#allocation6 + $0x68] sm:$0xff]
    %v107 = vld [vmem:[#allocation6 + $0x70] sm:$0xff]
    %v108 = vld [vmem:[#allocation6 + $0x78] sm:$0xff]
    %v109 = vld [vmem:[#allocation6 + $0x80] sm:$0xff]
    %v110 = vld [vmem:[#allocation6 + $0x88] sm:$0xff]
    %v111 = vld [vmem:[#allocation6 + $0x90] sm:$0xff]
    %v112 = vld [vmem:[#allocation6 + $0x98] sm:$0xff]
    %v113 = vld [vmem:[#allocation6 + $0xa0] sm:$0xff]
    %v114 = vld [vmem:[#allocation6 + $0xa8] sm:$0xff]
    %v115 = vld [vmem:[#allocation6 + $0xb0] sm:$0xff]
    %v116 = vld [vmem:[#allocation6 + $0xb8] sm:$0xff]
    %v117 = vld [vmem:[#allocation6 + $0xc0] sm:$0xff]
    %v118 = vld [vmem:[#allocation6 + $0xc8] sm:$0xff]
    %v119 = vld [vmem:[#allocation6 + $0xd0] sm:$0xff]
    %v120 = vld [vmem:[#allocation6 + $0xd8] sm:$0xff]
    %v121 = vld [vmem:[#allocation6 + $0xe0] sm:$0xff]
    %v122 = vld [vmem:[#allocation6 + $0xe8] sm:$0xff]
    %v123 = vld [vmem:[#allocation6 + $0xf0] sm:$0xff]
    %v124 = vld [vmem:[#allocation6 + $0xf8] sm:$0xff]
    %v125 = vld [vmem:[#allocation8] sm:$0x3]
    %v127 = vlaneseq
    %v128 = vshrl.u32 %v127, 7
    %v129 = vsub.s32 0, %v128
    %v130 = vrot.slane %v125, %v129
    %v131 = vlaneseq
    %v132 = vshrl.u32 %v131, 7
    %v133 = vsub.s32 1, %v132
    %v134 = vrot.slane %v125, %v133
    %137 = vmatprep.subr.mxu0 %v94
    %138 = vmatpush1.msra.mxu0 %v93
    %139 = vmatprep.subr.mxu0 %v96
    %140 = vmatpush1.msra.mxu0 %v95
    %141 = vmatprep.subr.mxu0 %v98
    %142 = vmatpush1.msra.mxu0 %v97
    %143 = vmatprep.subr.mxu0 %v100
    %144 = vmatpush1.msra.mxu0 %v99
    %145 = vmatprep.subr.mxu0 %v102
    %146 = vmatpush1.msra.mxu0 %v101
    %147 = vmatprep.subr.mxu0 %v104
    %148 = vmatpush1.msra.mxu0 %v103
    %149 = vmatprep.subr.mxu0 %v106
    %150 = vmatpush1.msra.mxu0 %v105
    %151 = vmatprep.subr.mxu0 %v108
    %152 = vmatpush1.msra.mxu0 %v107
    %153 = vmatprep.subr.mxu0 %v110
    %154 = vmatpush1.msra.mxu0 %v109
    %155 = vmatprep.subr.mxu0 %v112
    %156 = vmatpush1.msra.mxu0 %v111
    %157 = vmatprep.subr.mxu0 %v114
    %158 = vmatpush1.msra.mxu0 %v113
    %159 = vmatprep.subr.mxu0 %v116
    %160 = vmatpush1.msra.mxu0 %v115
    %161 = vmatprep.subr.mxu0 %v118
    %162 = vmatpush1.msra.mxu0 %v117
    %163 = vmatprep.subr.mxu0 %v120
    %164 = vmatpush1.msra.mxu0 %v119
    %165 = vmatprep.subr.mxu0 %v122
    %166 = vmatpush1.msra.mxu0 %v121
    %167 = vmatprep.subr.mxu0 %v124
    %168 = vmatpush1.msra.mxu0 %v123
    %169 = vmatprep.subr.mxu0 0.0
    %170 = vmatpush1.msra.mxu0 0.0
    %171 = vmatprep.subr.mxu0 0.0
    %172 = vmatpush1.msra.mxu0 0.0
    %173 = vmatprep.subr.mxu0 0.0
    %174 = vmatpush1.msra.mxu0 0.0
    %175 = vmatprep.subr.mxu0 0.0
    %176 = vmatpush1.msra.mxu0 0.0
    %177 = vmatprep.subr.mxu0 0.0
    %178 = vmatpush1.msra.mxu0 0.0
    %179 = vmatprep.subr.mxu0 0.0
    %180 = vmatpush1.msra.mxu0 0.0
    %181 = vmatprep.subr.mxu0 0.0
    %182 = vmatpush1.msra.mxu0 0.0
    %183 = vmatprep.subr.mxu0 0.0
    %184 = vmatpush1.msra.mxu0 0.0
    %185 = vmatprep.subr.mxu0 0.0
    %186 = vmatpush1.msra.mxu0 0.0
    %187 = vmatprep.subr.mxu0 0.0
    %188 = vmatpush1.msra.mxu0 0.0
    %189 = vmatprep.subr.mxu0 0.0
    %190 = vmatpush1.msra.mxu0 0.0
    %191 = vmatprep.subr.mxu0 0.0
    %192 = vmatpush1.msra.mxu0 0.0
    %193 = vmatprep.subr.mxu0 0.0
    %194 = vmatpush1.msra.mxu0 0.0
    %195 = vmatprep.subr.mxu0 0.0
    %196 = vmatpush1.msra.mxu0 0.0
    %197 = vmatprep.subr.mxu0 0.0
    %198 = vmatpush1.msra.mxu0 0.0
    %199 = vmatprep.subr.mxu0 0.0
    %200 = vmatpush1.msra.mxu0 0.0
    %201 = vmatprep.mubr.f32.mxu0 0.0
    %202 = vmatmul.mubr.f32.gmra.mrb[0].mxu0 %v91
    %v203 = vpop.f32.mrb[0].mxu0
    %v204 = vadd.f32 %v130, %v203
    %v205 = vpop.f32.mrb[0].mxu0
    %v206 = vadd.f32 %v134, %v205
    %207 = vmatprep.mubr.f32.mxu0 0.0
    %208 = vmatmul.mubr.f32.gmra.mrb[0].mxu0 %v92
    %v209 = vpop.f32.mrb[0].mxu0
    %v210 = vadd.f32 %v130, %v209
    %v211 = vpop.f32.mrb[0].mxu0
    %v212 = vadd.f32 %v134, %v211
    %213 = vdwg.mxu0
    %v214 = vld [vmem:[#allocation2] sm:$0xff]
    %v215 = vld [vmem:[#allocation2 + $0x8] sm:$0xff]
    %v216 = vld [vmem:[#allocation9] sm:$0xff]
    %v217 = vld [vmem:[#allocation9 + $0x8] sm:$0xff]
    %v218 = vld [vmem:[#allocation9 + $0x10] sm:$0xff]
    %v219 = vld [vmem:[#allocation9 + $0x18] sm:$0xff]
    %v220 = vld [vmem:[#allocation9 + $0x20] sm:$0xff]
    %v221 = vld [vmem:[#allocation9 + $0x28] sm:$0xff]
    %v222 = vld [vmem:[#allocation9 + $0x30] sm:$0xff]
    %v223 = vld [vmem:[#allocation9 + $0x38] sm:$0xff]
    %v224 = vld [vmem:[#allocation9 + $0x40] sm:$0xff]
    %v225 = vld [vmem:[#allocation9 + $0x48] sm:$0xff]
    %v226 = vld [vmem:[#allocation9 + $0x50] sm:$0xff]
    %v227 = vld [vmem:[#allocation9 + $0x58] sm:$0xff]
    %v228 = vld [vmem:[#allocation9 + $0x60] sm:$0xff]
    %v229 = vld [vmem:[#allocation9 + $0x68] sm:$0xff]
    %v230 = vld [vmem:[#allocation9 + $0x70] sm:$0xff]
    %v231 = vld [vmem:[#allocation9 + $0x78] sm:$0xff]
    %v232 = vld [vmem:[#allocation9 + $0x80] sm:$0xff]
    %v233 = vld [vmem:[#allocation9 + $0x88] sm:$0xff]
    %v234 = vld [vmem:[#allocation9 + $0x90] sm:$0xff]
    %v235 = vld [vmem:[#allocation9 + $0x98] sm:$0xff]
    %v236 = vld [vmem:[#allocation9 + $0xa0] sm:$0xff]
    %v237 = vld [vmem:[#allocation9 + $0xa8] sm:$0xff]
    %v238 = vld [vmem:[#allocation9 + $0xb0] sm:$0xff]
    %v239 = vld [vmem:[#allocation9 + $0xb8] sm:$0xff]
    %v240 = vld [vmem:[#allocation9 + $0xc0] sm:$0xff]
    %v241 = vld [vmem:[#allocation9 + $0xc8] sm:$0xff]
    %v242 = vld [vmem:[#allocation9 + $0xd0] sm:$0xff]
    %v243 = vld [vmem:[#allocation9 + $0xd8] sm:$0xff]
    %v244 = vld [vmem:[#allocation9 + $0xe0] sm:$0xff]
    %v245 = vld [vmem:[#allocation9 + $0xe8] sm:$0xff]
    %v246 = vld [vmem:[#allocation9 + $0xf0] sm:$0xff]
    %v247 = vld [vmem:[#allocation9 + $0xf8] sm:$0xff]
    %248 = vmatprep.subr.mxu0 0.0
    %249 = vmatpush1.msra.mxu0 %v216
    %250 = vmatprep.subr.mxu0 0.0
    %251 = vmatpush1.msra.mxu0 %v217
    %252 = vmatprep.subr.mxu0 0.0
    %253 = vmatpush1.msra.mxu0 %v218
    %254 = vmatprep.subr.mxu0 0.0
    %255 = vmatpush1.msra.mxu0 %v219
    %256 = vmatprep.subr.mxu0 0.0
    %257 = vmatpush1.msra.mxu0 %v220
    %258 = vmatprep.subr.mxu0 0.0
    %259 = vmatpush1.msra.mxu0 %v221
    %260 = vmatprep.subr.mxu0 0.0
    %261 = vmatpush1.msra.mxu0 %v222
    %262 = vmatprep.subr.mxu0 0.0
    %263 = vmatpush1.msra.mxu0 %v223
    %264 = vmatprep.subr.mxu0 0.0
    %265 = vmatpush1.msra.mxu0 %v224
    %266 = vmatprep.subr.mxu0 0.0
    %267 = vmatpush1.msra.mxu0 %v225
    %268 = vmatprep.subr.mxu0 0.0
    %269 = vmatpush1.msra.mxu0 %v226
    %270 = vmatprep.subr.mxu0 0.0
    %271 = vmatpush1.msra.mxu0 %v227
    %272 = vmatprep.subr.mxu0 0.0
    %273 = vmatpush1.msra.mxu0 %v228
    %274 = vmatprep.subr.mxu0 0.0
    %275 = vmatpush1.msra.mxu0 %v229
    %276 = vmatprep.subr.mxu0 0.0
    %277 = vmatpush1.msra.mxu0 %v230
    %278 = vmatprep.subr.mxu0 0.0
    %279 = vmatpush1.msra.mxu0 %v231
    %280 = vmatprep.subr.mxu0 0.0
    %281 = vmatpush1.msra.mxu0 %v232
    %282 = vmatprep.subr.mxu0 0.0
    %283 = vmatpush1.msra.mxu0 %v233
    %284 = vmatprep.subr.mxu0 0.0
    %285 = vmatpush1.msra.mxu0 %v234
    %286 = vmatprep.subr.mxu0 0.0
    %287 = vmatpush1.msra.mxu0 %v235
    %288 = vmatprep.subr.mxu0 0.0
    %289 = vmatpush1.msra.mxu0 %v236
    %290 = vmatprep.subr.mxu0 0.0
    %291 = vmatpush1.msra.mxu0 %v237
    %292 = vmatprep.subr.mxu0 0.0
    %293 = vmatpush1.msra.mxu0 %v238
    %294 = vmatprep.subr.mxu0 0.0
    %295 = vmatpush1.msra.mxu0 %v239
    %296 = vmatprep.subr.mxu0 0.0
    %297 = vmatpush1.msra.mxu0 %v240
    %298 = vmatprep.subr.mxu0 0.0
    %299 = vmatpush1.msra.mxu0 %v241
    %300 = vmatprep.subr.mxu0 0.0
    %301 = vmatpush1.msra.mxu0 %v242
    %302 = vmatprep.subr.mxu0 0.0
    %303 = vmatpush1.msra.mxu0 %v243
    %304 = vmatprep.subr.mxu0 0.0
    %305 = vmatpush1.msra.mxu0 %v244
    %306 = vmatprep.subr.mxu0 0.0
    %307 = vmatpush1.msra.mxu0 %v245
    %308 = vmatprep.subr.mxu0 0.0
    %309 = vmatpush1.msra.mxu0 %v246
    %310 = vmatprep.subr.mxu0 0.0
    %311 = vmatpush1.msra.mxu0 %v247
    %312 = vmatprep.mubr.f32.mxu0 %v206
    %313 = vmatmul.mubr.f32.gmra.mrb[0].mxu0 %v204
    %v314 = vpop.f32.mrb[0].mxu0
    %v315 = vadd.f32 0.0, %v314
    %v316 = vpop.f32.mrb[0].mxu0
    %317 = vmatprep.mubr.f32.mxu0 %v212
    %318 = vmatmul.mubr.f32.gmra.mrb[0].mxu0 %v210
    %v319 = vpop.f32.mrb[0].mxu0
    %v320 = vadd.f32 0.0, %v319
    %v321 = vpop.f32.mrb[0].mxu0
    %322 = vdwg.mxu0
    %v323 = vadd.f32 %v214, %v315
    %v324 = vadd.f32 %v215, %v320
    %325 = vst [vmem:[#allocation2] sm:$0xff] %v323
    %326 = vst [vmem:[#allocation2 + $0x8] sm:$0xff] %v324
    // Predicated region
    $region46: #{tpu_custom_call.1} parent=1 // pred_check
      %p327 = pneg %p85
    $region47: #{tpu_custom_call.1} parent=1 // pred_check_branch
      %329 = sbr.rel (%p327) target = $region49
    $region48: #{tpu_custom_call.1} parent=1 // pred_region
      %v330 = vld [vmem:[#allocation2] sm:$0xff]
      %v331 = vld [vmem:[#allocation2 + $0x8] sm:$0xff]
      %v332 = vld [vmem:[#allocation11] sm:$0x1]
      %v334 = vlaneseq
      %v335 = vshrl.u32 %v334, 7
      %v336 = vsub.s32 0, %v335
      %v337 = vrot.slane %v332, %v336
      %v339 = vadd.f32 %v330, %v337
      %v340 = vadd.f32 %v331, %v337
      %341 = vst [vmem:[#allocation12] sm:$0xff] %v339
      %342 = vst [vmem:[#allocation12 + $0x8] sm:$0xff] %v340
    $region49: #{tpu_custom_call.1} parent=1 // pred_fallthru
      _
    // Predicated region
    $region50: #{tpu_custom_call.1} parent=1 // pred_check
      _
    $region51: #{tpu_custom_call.1} parent=1 // pred_check_branch
      %344 = sbr.rel (0) target = $region53
    $region52: #{tpu_custom_call.1} parent=1 // pred_region
      %s346 = ssub.s32 256, 256
      %347 = vsyncadd [#allocation5], %s346
      %s348 = sshll.u32 [#allocation12], 4
      %s349 = int_to_ptr.vmem [resolvable:$true] %s348
      %354 = dma.vmem_to_hbm [thread:$0]  %s349, 256, %s5, [#allocation5], 128, 128, 8
    $region53: #{tpu_custom_call.1} parent=1 // pred_fallthru
      _
    // Predicated region
    $region54: #{tpu_custom_call.1} parent=1 // pred_check
      _
    $region55: #{tpu_custom_call.1} parent=1 // pred_check_branch
      %356 = sbr.rel (0) target = $region57
    $region56: #{tpu_custom_call.1} parent=1 // pred_region
      %357 = dma.done [#allocation5], 256
    $region57: #{tpu_custom_call.1} parent=1 // pred_fallthru
      _
    %358 = vsyncpa [#allocation4], 1
    %359 = vsyncpa [#allocation7], 1
    %360 = vsyncpa [#allocation10], 1
    %361 = vsyncpa [#allocation5], 1

</llo_original>
